<compile_context>
chip_gen: v7x
topology: tpu7x:2x2x1
jax: 0.10.0
libtpu: 0.0.40
codegen_flags: <defaults>
</compile_context>

<pallas_src>
import functools
from typing import NamedTuple, Tuple

import jax
import jax.numpy as jnp
from jax.experimental import pallas as pl
from jax.experimental.pallas import tpu as pltpu

_LANE = 128
_SUBLANE = 8


def _round_up(x: int, m: int) -> int:
    return ((x + m - 1) // m) * m


class _TowerMeta(NamedTuple):
    layout: Tuple[Tuple[int, int, int], ...]   # per layer: (row_off, in_pad, out_pad)
    in_dim: int
    out_dim: int
    in_pad: int
    out_pad: int
    slab_width: int


class _Meta(NamedTuple):
    t1: _TowerMeta
    t2: _TowerMeta


# ---------------------------------------------------------------------------
# One-time packing: pad every layer width to a multiple of 128 and stack all
# of a tower's weights into a single lane-dense slab (+ one bias slab).
# ---------------------------------------------------------------------------
def _pack_tower(params, weight_dtype):
    in_dim = params[0][0].shape[0]
    out_dim = params[-1][0].shape[1]
    in_pad = _round_up(max(in_dim, _LANE), _LANE)

    pads = [in_pad]
    for (w, _) in params:
        pads.append(_round_up(max(w.shape[1], _LANE), _LANE))
    out_pad = pads[-1]
    width = max(pads[1:])

    layout = []
    w_blocks = []
    b_rows = []
    off = 0
    prev_real = in_dim
    for i, (w, b) in enumerate(params):
        fin, fout = w.shape
        assert fin == prev_real, "layer input dim must match previous output dim"
        prev_real = fout
        fin_p, fout_p = pads[i], pads[i + 1]
        wp = jnp.zeros((fin_p, width), jnp.float32).at[:fin, :fout].set(
            w.astype(jnp.float32))
        bp = jnp.zeros((width,), jnp.float32).at[:fout].set(b.astype(jnp.float32))
        w_blocks.append(wp)
        b_rows.append(bp)
        layout.append((off, fin_p, fout_p))
        off += fin_p

    w_slab = jnp.concatenate(w_blocks, axis=0).astype(weight_dtype)  # [rows, width]
    b_slab = jnp.stack(b_rows, axis=0)                               # [n_layers, width] f32
    meta = _TowerMeta(tuple(layout), in_dim, out_dim, in_pad, out_pad, width)
    return w_slab, b_slab, meta


def pack_deepcca_params(params1, params2, weight_dtype=jnp.bfloat16):
    """Call once (outside the training/forward loop)."""
    w1, b1, m1 = _pack_tower(params1, weight_dtype)
    w2, b2, m2 = _pack_tower(params2, weight_dtype)
    return (w1, b1, w2, b2), _Meta(m1, m2)


# ---------------------------------------------------------------------------
# Fused kernel: both towers, all layers, one launch, no grid.
# ---------------------------------------------------------------------------
def _deepcca_kernel(x1_ref, x2_ref, w1_ref, b1_ref, w2_ref, b2_ref,
                    o1_ref, o2_ref, *, layout1, layout2):
    def run_tower(x_ref, w_ref, b_ref, o_ref, layout):
        a = x_ref[...]                                   # f32 [bpad, in_pad]
        n = len(layout)
        for i, (off, fin, fout) in enumerate(layout):    # static unrolled layers
            w = w_ref[off:off + fin, :fout]              # bf16, static slice of slab
            b = b_ref[i:i + 1, :fout]                    # f32
            a = jnp.dot(a.astype(w_ref.dtype), w,
                        preferred_element_type=jnp.float32) + b
            if i != n - 1:
                a = jax.nn.sigmoid(a)                    # EUP, f32
        o_ref[...] = a.astype(o_ref.dtype)

    # Two independent dependency chains in one body: the scheduler can
    # interleave tower-2 matmuls / sigmoids under tower-1 MXU & EUP latency.
    run_tower(x1_ref, w1_ref, b1_ref, o1_ref, layout1)
    run_tower(x2_ref, w2_ref, b2_ref, o2_ref, layout2)


# ---------------------------------------------------------------------------
# Forward: one pallas_call, pre-packed params.
# ---------------------------------------------------------------------------
def deepcca_forward(packed, x1, x2, *, meta):
    w1, b1, w2, b2 = packed
    m1, m2 = meta.t1, meta.t2

    batch = x1.shape[0]
    assert x2.shape[0] == batch
    # NOTE: at batch=8 the MXU runs at a few % occupancy; fusing several
    # mini-batches into one call (bpad >= 128) is nearly free throughput.
    bpad = _round_up(max(batch, _SUBLANE), _SUBLANE)

    x1p = jnp.pad(x1.astype(jnp.float32),
                  ((0, bpad - batch), (0, m1.in_pad - x1.shape[1])))
    x2p = jnp.pad(x2.astype(jnp.float32),
                  ((0, bpad - batch), (0, m2.in_pad - x2.shape[1])))

    # Advisory cost estimate so XLA can overlap this call with surrounding work.
    flops = 0
    transc = 0
    w_itemsize = jnp.dtype(w1.dtype).itemsize
    bytes_accessed = (x1p.size + x2p.size) * 4
    bytes_accessed += bpad * (m1.out_pad + m2.out_pad) * 4
    bytes_accessed += (w1.size + w2.size) * w_itemsize + (b1.size + b2.size) * 4
    for m in (m1, m2):
        n = len(m.layout)
        for i, (_, fin, fout) in enumerate(m.layout):
            flops += 2 * bpad * fin * fout
            if i != n - 1:
                transc += bpad * fout

    # Everything is VMEM-resident (no grid => no double-buffering).  Only raise
    # the scoped-vmem limit when the resident footprint actually needs it.
    # TODO(synk): for 1-2k feature DeepCCA towers on v7x (64 MiB VMEM), switch
    # to a K-tiled pipeline (pltpu.emit_pipeline) instead of all-resident slabs.
    needed = 2 * bytes_accessed
    vmem_limit = int(min(needed, 64 * 1024 * 1024)) if needed > (32 << 20) else None

    kernel = functools.partial(_deepcca_kernel,
                               layout1=m1.layout, layout2=m2.layout)
    vmem = lambda: pl.BlockSpec(memory_space=pltpu.MemorySpace.VMEM)

    o1, o2 = pl.pallas_call(
        kernel,
        out_shape=(jax.ShapeDtypeStruct((bpad, m1.out_pad), jnp.float32),
                   jax.ShapeDtypeStruct((bpad, m2.out_pad), jnp.float32)),
        in_specs=[vmem() for _ in range(6)],
        out_specs=(vmem(), vmem()),
        compiler_params=pltpu.CompilerParams(vmem_limit_bytes=vmem_limit),
        cost_estimate=pl.CostEstimate(flops=int(flops),
                                      transcendentals=int(transc),
                                      bytes_accessed=int(bytes_accessed)),
    )(x1p, x2p, w1, b1, w2, b2)

    return o1[:batch, :m1.out_dim], o2[:batch, :m2.out_dim]


# ---------------------------------------------------------------------------
# Deterministic parameter init (mimics nn.Linear default: U(-1/sqrt(in), 1/sqrt(in)))
# Weights are stored as [in, out] so y = x @ W + b  (== PyTorch x @ W.T + b).
# ---------------------------------------------------------------------------
def init_mlp_params(key, input_size, layer_sizes, dtype=jnp.float32):
    sizes = [input_size] + list(layer_sizes)
    params = []
    for l_id in range(len(sizes) - 1):
        fan_in, fan_out = sizes[l_id], sizes[l_id + 1]
        key, kw, kb = jax.random.split(key, 3)
        bound = 1.0 / (fan_in ** 0.5)
        w = jax.random.uniform(kw, (fan_in, fan_out), dtype, -bound, bound)
        b = jax.random.uniform(kb, (fan_out,), dtype, -bound, bound)
        params.append((w, b))
    return key, params


if __name__ == "__main__":
    key = jax.random.PRNGKey(0)

    # Small shapes consistent with DeepCCA's [batch, feats] inputs.
    batch = 8
    input_size1, layer_sizes1 = 32, [32, 32, 16]   # outdim_size = 16
    input_size2, layer_sizes2 = 24, [32, 16]

    key, params1 = init_mlp_params(key, input_size1, layer_sizes1)
    key, params2 = init_mlp_params(key, input_size2, layer_sizes2)

    key, k1, k2 = jax.random.split(key, 3)
    x1 = jax.random.normal(k1, (batch, input_size1), jnp.float32)
    x2 = jax.random.normal(k2, (batch, input_size2), jnp.float32)

    # One-time packing/padding (hoisted out of the forward path).
    packed, meta = pack_deepcca_params(params1, params2, weight_dtype=jnp.bfloat16)
    fwd = jax.jit(functools.partial(deepcca_forward, meta=meta))

    out1, out2 = fwd(packed, x1, x2)
    jax.block_until_ready((out1, out2))

    # Pure-JAX references.
    def ref_mlp(x, params, cast_dtype=None):
        a = x.astype(jnp.float32)
        n = len(params)
        for i, (w, b) in enumerate(params):
            lhs = a
            rhs = w.astype(jnp.float32)
            if cast_dtype is not None:    # mirror the kernel's bf16 MXU inputs
                lhs = lhs.astype(cast_dtype).astype(jnp.float32)
                rhs = rhs.astype(cast_dtype).astype(jnp.float32)
            a = lhs @ rhs + b.astype(jnp.float32)
            if i != n - 1:
                a = jax.nn.sigmoid(a)
        return a

    assert out1.shape == (batch, layer_sizes1[-1])
    assert out2.shape == (batch, layer_sizes2[-1])

    # Tight check vs bf16-input reference (same rounding as the kernel's MXU path).
    r1 = ref_mlp(x1, params1, jnp.bfloat16)
    r2 = ref_mlp(x2, params2, jnp.bfloat16)
    assert jnp.allclose(out1, r1, atol=5e-4), float(jnp.abs(out1 - r1).max())
    assert jnp.allclose(out2, r2, atol=5e-4), float(jnp.abs(out2 - r2).max())

    # Semantic check vs full-f32 PyTorch-equivalent forward (bf16 weight storage
    # introduces ~1e-3 absolute error).
    f1 = ref_mlp(x1, params1)
    f2 = ref_mlp(x2, params2)
    assert jnp.allclose(out1, f1, atol=3e-2), float(jnp.abs(out1 - f1).max())
    assert jnp.allclose(out2, f2, atol=3e-2), float(jnp.abs(out2 - f2).max())

    print("KERNEL_OK")
</pallas_src>

<mosaic_0001>
module attributes {stable_mosaic.version = 11 : i64} {
  func.func @_deepcca_kernel(%arg0: memref<8x128xf32, #tpu.memory_space<vmem>>, %arg1: memref<8x128xf32, #tpu.memory_space<vmem>>, %arg2: memref<384x128xbf16, #tpu.memory_space<vmem>>, %arg3: memref<3x128xf32, #tpu.memory_space<vmem>>, %arg4: memref<256x128xbf16, #tpu.memory_space<vmem>>, %arg5: memref<2x128xf32, #tpu.memory_space<vmem>>, %arg6: memref<8x128xf32, #tpu.memory_space<vmem>>, %arg7: memref<8x128xf32, #tpu.memory_space<vmem>>) attributes {dimension_semantics = [], scalar_prefetch = 0 : i64, scratch_operands = 0 : i64, tpu.core_type = #tpu.core_type<tc>} {
    %c0 = arith.constant 0 : index
    %c0_0 = arith.constant 0 : index
    %0 = vector.load %arg0[%c0, %c0_0] : memref<8x128xf32, #tpu.memory_space<vmem>>, vector<8x128xf32>
    %c0_1 = arith.constant 0 : index
    %c0_2 = arith.constant 0 : index
    %1 = vector.load %arg2[%c0_1, %c0_2] : memref<384x128xbf16, #tpu.memory_space<vmem>>, vector<128x128xbf16>
    %c0_3 = arith.constant 0 : index
    %c0_4 = arith.constant 0 : index
    %2 = vector.load %arg3[%c0_3, %c0_4] : memref<3x128xf32, #tpu.memory_space<vmem>>, vector<1x128xf32>
    %3 = arith.truncf %0 : vector<8x128xf32> to vector<8x128xbf16>
    %cst = arith.constant dense<0.000000e+00> : vector<8x128xf32>
    %4 = tpu.matmul %3, %1, %cst {dimension_numbers = #tpu.dot_dimension_numbers<[1], [0], [0], [1], [0, 0, 1, 1], [], []>} : vector<8x128xbf16>, vector<128x128xbf16>, vector<8x128xf32> -> vector<8x128xf32>
    %5 = vector.broadcast %2 : vector<1x128xf32> to vector<8x128xf32>
    %6 = arith.addf %4, %5 : vector<8x128xf32>
    %7 = arith.negf %6 : vector<8x128xf32>
    %8 = math.exp %7 : vector<8x128xf32>
    %cst_5 = arith.constant 1.000000e+00 : f32
    %9 = vector.broadcast %cst_5 : f32 to vector<8x128xf32>
    %10 = arith.addf %9, %8 : vector<8x128xf32>
    %11 = arith.divf %9, %10 : vector<8x128xf32>
    %c128 = arith.constant 128 : index
    %c0_6 = arith.constant 0 : index
    %12 = vector.load %arg2[%c128, %c0_6] : memref<384x128xbf16, #tpu.memory_space<vmem>>, vector<128x128xbf16>
    %c1 = arith.constant 1 : index
    %c0_7 = arith.constant 0 : index
    %13 = vector.load %arg3[%c1, %c0_7] : memref<3x128xf32, #tpu.memory_space<vmem>>, vector<1x128xf32>
    %14 = arith.truncf %11 : vector<8x128xf32> to vector<8x128xbf16>
    %cst_8 = arith.constant dense<0.000000e+00> : vector<8x128xf32>
    %15 = tpu.matmul %14, %12, %cst_8 {dimension_numbers = #tpu.dot_dimension_numbers<[1], [0], [0], [1], [0, 0, 1, 1], [], []>} : vector<8x128xbf16>, vector<128x128xbf16>, vector<8x128xf32> -> vector<8x128xf32>
    %16 = vector.broadcast %13 : vector<1x128xf32> to vector<8x128xf32>
    %17 = arith.addf %15, %16 : vector<8x128xf32>
    %18 = arith.negf %17 : vector<8x128xf32>
    %19 = math.exp %18 : vector<8x128xf32>
    %cst_9 = arith.constant 1.000000e+00 : f32
    %20 = vector.broadcast %cst_9 : f32 to vector<8x128xf32>
    %21 = arith.addf %20, %19 : vector<8x128xf32>
    %22 = arith.divf %20, %21 : vector<8x128xf32>
    %c256 = arith.constant 256 : index
    %c0_10 = arith.constant 0 : index
    %23 = vector.load %arg2[%c256, %c0_10] : memref<384x128xbf16, #tpu.memory_space<vmem>>, vector<128x128xbf16>
    %c2 = arith.constant 2 : index
    %c0_11 = arith.constant 0 : index
    %24 = vector.load %arg3[%c2, %c0_11] : memref<3x128xf32, #tpu.memory_space<vmem>>, vector<1x128xf32>
    %25 = arith.truncf %22 : vector<8x128xf32> to vector<8x128xbf16>
    %cst_12 = arith.constant dense<0.000000e+00> : vector<8x128xf32>
    %26 = tpu.matmul %25, %23, %cst_12 {dimension_numbers = #tpu.dot_dimension_numbers<[1], [0], [0], [1], [0, 0, 1, 1], [], []>} : vector<8x128xbf16>, vector<128x128xbf16>, vector<8x128xf32> -> vector<8x128xf32>
    %27 = vector.broadcast %24 : vector<1x128xf32> to vector<8x128xf32>
    %28 = arith.addf %26, %27 : vector<8x128xf32>
    %c0_13 = arith.constant 0 : index
    %c0_14 = arith.constant 0 : index
    %29 = vector.load %arg6[%c0_13, %c0_14] : memref<8x128xf32, #tpu.memory_space<vmem>>, vector<8x128xf32>
    tpu.vector_store %arg6[%c0_13, %c0_14], %28 {strides = array<i32>} : memref<8x128xf32, #tpu.memory_space<vmem>>, vector<8x128xf32>,
    %c0_15 = arith.constant 0 : index
    %c0_16 = arith.constant 0 : index
    %30 = vector.load %arg1[%c0_15, %c0_16] : memref<8x128xf32, #tpu.memory_space<vmem>>, vector<8x128xf32>
    %c0_17 = arith.constant 0 : index
    %c0_18 = arith.constant 0 : index
    %31 = vector.load %arg4[%c0_17, %c0_18] : memref<256x128xbf16, #tpu.memory_space<vmem>>, vector<128x128xbf16>
    %c0_19 = arith.constant 0 : index
    %c0_20 = arith.constant 0 : index
    %32 = vector.load %arg5[%c0_19, %c0_20] : memref<2x128xf32, #tpu.memory_space<vmem>>, vector<1x128xf32>
    %33 = arith.truncf %30 : vector<8x128xf32> to vector<8x128xbf16>
    %cst_21 = arith.constant dense<0.000000e+00> : vector<8x128xf32>
    %34 = tpu.matmul %33, %31, %cst_21 {dimension_numbers = #tpu.dot_dimension_numbers<[1], [0], [0], [1], [0, 0, 1, 1], [], []>} : vector<8x128xbf16>, vector<128x128xbf16>, vector<8x128xf32> -> vector<8x128xf32>
    %35 = vector.broadcast %32 : vector<1x128xf32> to vector<8x128xf32>
    %36 = arith.addf %34, %35 : vector<8x128xf32>
    %37 = arith.negf %36 : vector<8x128xf32>
    %38 = math.exp %37 : vector<8x128xf32>
    %cst_22 = arith.constant 1.000000e+00 : f32
    %39 = vector.broadcast %cst_22 : f32 to vector<8x128xf32>
    %40 = arith.addf %39, %38 : vector<8x128xf32>
    %41 = arith.divf %39, %40 : vector<8x128xf32>
    %c128_23 = arith.constant 128 : index
    %c0_24 = arith.constant 0 : index
    %42 = vector.load %arg4[%c128_23, %c0_24] : memref<256x128xbf16, #tpu.memory_space<vmem>>, vector<128x128xbf16>
    %c1_25 = arith.constant 1 : index
    %c0_26 = arith.constant 0 : index
    %43 = vector.load %arg5[%c1_25, %c0_26] : memref<2x128xf32, #tpu.memory_space<vmem>>, vector<1x128xf32>
    %44 = arith.truncf %41 : vector<8x128xf32> to vector<8x128xbf16>
    %cst_27 = arith.constant dense<0.000000e+00> : vector<8x128xf32>
    %45 = tpu.matmul %44, %42, %cst_27 {dimension_numbers = #tpu.dot_dimension_numbers<[1], [0], [0], [1], [0, 0, 1, 1], [], []>} : vector<8x128xbf16>, vector<128x128xbf16>, vector<8x128xf32> -> vector<8x128xf32>
    %46 = vector.broadcast %43 : vector<1x128xf32> to vector<8x128xf32>
    %47 = arith.addf %45, %46 : vector<8x128xf32>
    %c0_28 = arith.constant 0 : index
    %c0_29 = arith.constant 0 : index
    %48 = vector.load %arg7[%c0_28, %c0_29] : memref<8x128xf32, #tpu.memory_space<vmem>>, vector<8x128xf32>
    tpu.vector_store %arg7[%c0_28, %c0_29], %47 {strides = array<i32>} : memref<8x128xf32, #tpu.memory_space<vmem>>, vector<8x128xf32>,
    return
  }
}

</mosaic_0001>

<llo_original>
// kernel: deepcca_forward.1
$region0: #{deepcca_forward.1}
  #allocation0 [shape = 'u32[]', space=smem, size = 0x4, offset = 0x4, fixed_abs, tag = 'smem constant byte address 0x4 - core index']
  #allocation1 [shape = 'u32[144,128]{1,0:T(1,128)}', space=vmem, size = 0x12000, scoped, tag = 'internal scratch']
  %s0 = inlined_call_operand.vmem [shape: f32[8,128], index: 0, kind: input, shape index: {}]
  %s1 = inlined_call_operand.vmem [shape: f32[8,128], index: 1, kind: input, shape index: {}]
  %s2 = inlined_call_operand.hbm [shape: bf16[384,128], index: 2, kind: input, shape index: {}]
  %s3 = inlined_call_operand.vmem [shape: f32[3,128], index: 3, kind: input, shape index: {}]
  %s4 = inlined_call_operand.hbm [shape: bf16[256,128], index: 4, kind: input, shape index: {}]
  %s5 = inlined_call_operand.vmem [shape: f32[2,128], index: 5, kind: input, shape index: {}]
  %s6 = inlined_call_operand.hbm [shape: f32[8,128], index: 6, kind: output, shape index: {0}]
  %s7 = inlined_call_operand.hbm [shape: f32[8,128], index: 7, kind: output, shape index: {1}]
  %8 = xla_tuple %s6, %s7
  %s9 = sld [smem:[#allocation0]]
  $region50: #{deepcca_forward.1} parent=0
    _
  %s11 = ssub.s32 1, %s9
  %s12 = scalar_select 0, %s11, %s9
  $region1: #{deepcca_forward.1} parent=0
    #allocation2 [shape = 'u8[98304]{0}', space=vmem, size = 0x18000, scoped, tag = 'input window, operand 2, single buffered']
    #allocation3 [shape = 's32[1]{0}', space=sflag, size = 0x4, scoped, tag = 'scoped memory for deepcca_forward.1']
    #allocation4 [shape = 's32[1]{0}', space=sflag, size = 0x4, scoped, tag = 'scoped memory for deepcca_forward.1']
    #allocation5 [shape = 'u8[65536]{0}', space=vmem, size = 0x10000, scoped, tag = 'input window, operand 4, single buffered']
    #allocation6 [shape = 's32[1]{0}', space=sflag, size = 0x4, scoped, tag = 'scoped memory for deepcca_forward.1']
    #allocation7 [shape = 'u8[4096]{0}', space=vmem, size = 0x1000, scoped, tag = 'output window, operand 0, single buffered']
    #allocation8 [shape = 'u8[4096]{0}', space=vmem, size = 0x1000, scoped, tag = 'output window, operand 1, single buffered']
    #allocation9 [shape = 's32[1]{0}', space=sflag, size = 0x4, scoped, tag = 'scoped memory for deepcca_forward.1']
    %13 = vsyncpa [#allocation3], 0
    %14 = vsyncpa [#allocation6], 0
    %15 = vsyncpa [#allocation4], 0
    %16 = vsyncpa [#allocation9], 0
    // Predicated region
    $region2: #{deepcca_forward.1} parent=1 // pred_check
      _
    $region3: #{deepcca_forward.1} parent=1 // pred_check_branch
      %18 = sbr.rel (0) target = $region5
    $region4: #{deepcca_forward.1} parent=1 // pred_region
      _
    $region5: #{deepcca_forward.1} parent=1 // pred_fallthru
      _
    // Predicated region
    $region6: #{deepcca_forward.1} parent=1 // pred_check
      _
    $region7: #{deepcca_forward.1} parent=1 // pred_check_branch
      %20 = sbr.rel (0) target = $region9
    $region8: #{deepcca_forward.1} parent=1 // pred_region
      _
    $region9: #{deepcca_forward.1} parent=1 // pred_fallthru
      _
    // Predicated region
    $region10: #{deepcca_forward.1} parent=1 // pred_check
      _
    $region11: #{deepcca_forward.1} parent=1 // pred_check_branch
      %22 = sbr.rel (0) target = $region13
    $region12: #{deepcca_forward.1} parent=1 // pred_region
      %s24 = ssub.s32 3072, 3072
      %25 = vsyncadd [#allocation3], %s24
      %s26 = sshll.u32 [#allocation2], 4
      %s27 = int_to_ptr.vmem [resolvable:$true] %s26
      %32 = dma.hbm_to_vmem [thread:$0]  %s2, 3072, %s27, [#allocation3], 64, 64, 4
    $region13: #{deepcca_forward.1} parent=1 // pred_fallthru
      _
    // Predicated region
    $region14: #{deepcca_forward.1} parent=1 // pred_check
      _
    $region15: #{deepcca_forward.1} parent=1 // pred_check_branch
      %34 = sbr.rel (0) target = $region17
    $region16: #{deepcca_forward.1} parent=1 // pred_region
      _
    $region17: #{deepcca_forward.1} parent=1 // pred_fallthru
      _
    // Predicated region
    $region18: #{deepcca_forward.1} parent=1 // pred_check
      _
    $region19: #{deepcca_forward.1} parent=1 // pred_check_branch
      %36 = sbr.rel (0) target = $region21
    $region20: #{deepcca_forward.1} parent=1 // pred_region
      %s38 = ssub.s32 2048, 2048
      %39 = vsyncadd [#allocation6], %s38
      %s40 = sshll.u32 [#allocation5], 4
      %s41 = int_to_ptr.vmem [resolvable:$true] %s40
      %46 = dma.hbm_to_vmem [thread:$0]  %s4, 2048, %s41, [#allocation6], 64, 64, 4
    $region21: #{deepcca_forward.1} parent=1 // pred_fallthru
      _
    // Predicated region
    $region22: #{deepcca_forward.1} parent=1 // pred_check
      _
    $region23: #{deepcca_forward.1} parent=1 // pred_check_branch
      %48 = sbr.rel (0) target = $region25
    $region24: #{deepcca_forward.1} parent=1 // pred_region
      _
    $region25: #{deepcca_forward.1} parent=1 // pred_fallthru
      _
    // Predicated region
    $region26: #{deepcca_forward.1} parent=1 // pred_check
      _
    $region27: #{deepcca_forward.1} parent=1 // pred_check_branch
      %50 = sbr.rel (0) target = $region29
    $region28: #{deepcca_forward.1} parent=1 // pred_region
      %51 = dma.done [#allocation3], 3072
    $region29: #{deepcca_forward.1} parent=1 // pred_fallthru
      _
    // Predicated region
    $region30: #{deepcca_forward.1} parent=1 // pred_check
      _
    $region31: #{deepcca_forward.1} parent=1 // pred_check_branch
      %53 = sbr.rel (0) target = $region33
    $region32: #{deepcca_forward.1} parent=1 // pred_region
      %54 = dma.done [#allocation6], 2048
    $region33: #{deepcca_forward.1} parent=1 // pred_fallthru
      _
    %v56 = vld [vmem:[%s0] sm:$0xff]
    %v57 = vld [vmem:[#allocation2] sm:$0xf]
    %v58 = vld [vmem:[#allocation2 + $0x4] sm:$0xf]
    %v59 = vld [vmem:[#allocation2 + $0x8] sm:$0xf]
    %v60 = vld [vmem:[#allocation2 + $0xc] sm:$0xf]
    %v61 = vld [vmem:[#allocation2 + $0x10] sm:$0xf]
    %v62 = vld [vmem:[#allocation2 + $0x14] sm:$0xf]
    %v63 = vld [vmem:[#allocation2 + $0x18] sm:$0xf]
    %v64 = vld [vmem:[#allocation2 + $0x1c] sm:$0xf]
    %v65 = vld [vmem:[#allocation2 + $0x20] sm:$0xf]
    %v66 = vld [vmem:[#allocation2 + $0x24] sm:$0xf]
    %v67 = vld [vmem:[#allocation2 + $0x28] sm:$0xf]
    %v68 = vld [vmem:[#allocation2 + $0x2c] sm:$0xf]
    %v69 = vld [vmem:[#allocation2 + $0x30] sm:$0xf]
    %v70 = vld [vmem:[#allocation2 + $0x34] sm:$0xf]
    %v71 = vld [vmem:[#allocation2 + $0x38] sm:$0xf]
    %v72 = vld [vmem:[#allocation2 + $0x3c] sm:$0xf]
    %v73 = vld [vmem:[%s3] sm:$0x1]
    %v74 = vpack.c.bf16 %v56, %v56
    %v75 = vlaneseq
    %v76 = vshrl.u32 %v75, 7
    %v77 = vsub.s32 0, %v76
    %v78 = vrot.slane %v73, %v77
    %v95 = vunpack.c.l.b16 %v57
    %v96 = vunpack.c.l.b16 %v58
    %v97 = vunpack.c.l.b16 %v59
    %v98 = vunpack.c.l.b16 %v60
    %v99 = vunpack.c.l.b16 %v61
    %v100 = vunpack.c.l.b16 %v62
    %v101 = vunpack.c.l.b16 %v63
    %v102 = vunpack.c.l.b16 %v64
    %v103 = vunpack.c.l.b16 %v65
    %v104 = vunpack.c.l.b16 %v66
    %v105 = vunpack.c.l.b16 %v67
    %v106 = vunpack.c.l.b16 %v68
    %v107 = vunpack.c.l.b16 %v69
    %v108 = vunpack.c.l.b16 %v70
    %v109 = vunpack.c.l.b16 %v71
    %v110 = vunpack.c.l.b16 %v72
    %v111 = vpack.c.b16 %v96, %v95
    %v112 = vpack.c.b16 %v98, %v97
    %v113 = vpack.c.b16 %v100, %v99
    %v114 = vpack.c.b16 %v102, %v101
    %v115 = vpack.c.b16 %v104, %v103
    %v116 = vpack.c.b16 %v106, %v105
    %v117 = vpack.c.b16 %v108, %v107
    %v118 = vpack.c.b16 %v110, %v109
    %127 = vmatprep.subr.bf16.mxu0 0
    %128 = vmatpush1.bf16.msra.mxu0 %v111
    %129 = vmatprep.subr.bf16.mxu0 0
    %130 = vmatpush1.bf16.msra.mxu0 %v112
    %131 = vmatprep.subr.bf16.mxu0 0
    %132 = vmatpush1.bf16.msra.mxu0 %v113
    %133 = vmatprep.subr.bf16.mxu0 0
    %134 = vmatpush1.bf16.msra.mxu0 %v114
    %135 = vmatprep.subr.bf16.mxu0 0
    %136 = vmatpush1.bf16.msra.mxu0 %v115
    %137 = vmatprep.subr.bf16.mxu0 0
    %138 = vmatpush1.bf16.msra.mxu0 %v116
    %139 = vmatprep.subr.bf16.mxu0 0
    %140 = vmatpush1.bf16.msra.mxu0 %v117
    %141 = vmatprep.subr.bf16.mxu0 0
    %142 = vmatpush1.bf16.msra.mxu0 %v118
    %143 = vmatprep.subr.bf16.mxu0 0
    %144 = vmatpush1.bf16.msra.mxu0 0
    %145 = vmatprep.subr.bf16.mxu0 0
    %146 = vmatpush1.bf16.msra.mxu0 0
    %147 = vmatprep.subr.bf16.mxu0 0
    %148 = vmatpush1.bf16.msra.mxu0 0
    %149 = vmatprep.subr.bf16.mxu0 0
    %150 = vmatpush1.bf16.msra.mxu0 0
    %151 = vmatprep.subr.bf16.mxu0 0
    %152 = vmatpush1.bf16.msra.mxu0 0
    %153 = vmatprep.subr.bf16.mxu0 0
    %154 = vmatpush1.bf16.msra.mxu0 0
    %155 = vmatprep.subr.bf16.mxu0 0
    %156 = vmatpush1.bf16.msra.mxu0 0
    %157 = vmatprep.subr.bf16.mxu0 0
    %158 = vmatpush1.bf16.msra.mxu0 0
    %159 = vmatprep.mubr.bf16.mxu0 0
    %160 = vmatmul.mubr.bf16.gmra.mrb[0].mxu0 %v74
    %v161 = vpop.f32.mrb[0].mxu0
    %v162 = vadd.f32 %v78, %v161
    %v163 = vpop.f32.mrb[0].mxu0
    %v164 = vpop.f32.mrb[0].mxu0
    %v165 = vpop.f32.mrb[0].mxu0
    %166 = vdwg.mxu0
    %v167 = vxor.u32 %v162, 2147483648
    %v168 = vmul.f32 %v167, 1.442695
    %v169 = vpow.pop %v168
    %v170 = vadd.f32 %v169, 1.0
    %v171 = vrcp.pop %v170
    %v172 = vmul.f32 1.0, %v171
    %v173 = vld [vmem:[#allocation2 + $0x40] sm:$0xf]
    %v174 = vld [vmem:[#allocation2 + $0x44] sm:$0xf]
    %v175 = vld [vmem:[#allocation2 + $0x48] sm:$0xf]
    %v176 = vld [vmem:[#allocation2 + $0x4c] sm:$0xf]
    %v177 = vld [vmem:[#allocation2 + $0x50] sm:$0xf]
    %v178 = vld [vmem:[#allocation2 + $0x54] sm:$0xf]
    %v179 = vld [vmem:[#allocation2 + $0x58] sm:$0xf]
    %v180 = vld [vmem:[#allocation2 + $0x5c] sm:$0xf]
    %v181 = vld [vmem:[#allocation2 + $0x60] sm:$0xf]
    %v182 = vld [vmem:[#allocation2 + $0x64] sm:$0xf]
    %v183 = vld [vmem:[#allocation2 + $0x68] sm:$0xf]
    %v184 = vld [vmem:[#allocation2 + $0x6c] sm:$0xf]
    %v185 = vld [vmem:[#allocation2 + $0x70] sm:$0xf]
    %v186 = vld [vmem:[#allocation2 + $0x74] sm:$0xf]
    %v187 = vld [vmem:[#allocation2 + $0x78] sm:$0xf]
    %v188 = vld [vmem:[#allocation2 + $0x7c] sm:$0xf]
    %v189 = vld [vmem:[%s3 + $0x1] sm:$0x1]
    %v190 = vpack.c.bf16 %v172, %v172
    %v191 = vlaneseq
    %v192 = vshrl.u32 %v191, 7
    %v193 = vsub.s32 0, %v192
    %v194 = vrot.slane %v189, %v193
    %v211 = vunpack.c.l.b16 %v173
    %v212 = vunpack.c.l.b16 %v174
    %v213 = vunpack.c.l.b16 %v175
    %v214 = vunpack.c.l.b16 %v176
    %v215 = vunpack.c.l.b16 %v177
    %v216 = vunpack.c.l.b16 %v178
    %v217 = vunpack.c.l.b16 %v179
    %v218 = vunpack.c.l.b16 %v180
    %v219 = vunpack.c.l.b16 %v181
    %v220 = vunpack.c.l.b16 %v182
    %v221 = vunpack.c.l.b16 %v183
    %v222 = vunpack.c.l.b16 %v184
    %v223 = vunpack.c.l.b16 %v185
    %v224 = vunpack.c.l.b16 %v186
    %v225 = vunpack.c.l.b16 %v187
    %v226 = vunpack.c.l.b16 %v188
    %v227 = vpack.c.b16 %v212, %v211
    %v228 = vpack.c.b16 %v214, %v213
    %v229 = vpack.c.b16 %v216, %v215
    %v230 = vpack.c.b16 %v218, %v217
    %v231 = vpack.c.b16 %v220, %v219
    %v232 = vpack.c.b16 %v222, %v221
    %v233 = vpack.c.b16 %v224, %v223
    %v234 = vpack.c.b16 %v226, %v225
    %243 = vmatprep.subr.bf16.mxu0 0
    %244 = vmatpush1.bf16.msra.mxu0 %v227
    %245 = vmatprep.subr.bf16.mxu0 0
    %246 = vmatpush1.bf16.msra.mxu0 %v228
    %247 = vmatprep.subr.bf16.mxu0 0
    %248 = vmatpush1.bf16.msra.mxu0 %v229
    %249 = vmatprep.subr.bf16.mxu0 0
    %250 = vmatpush1.bf16.msra.mxu0 %v230
    %251 = vmatprep.subr.bf16.mxu0 0
    %252 = vmatpush1.bf16.msra.mxu0 %v231
    %253 = vmatprep.subr.bf16.mxu0 0
    %254 = vmatpush1.bf16.msra.mxu0 %v232
    %255 = vmatprep.subr.bf16.mxu0 0
    %256 = vmatpush1.bf16.msra.mxu0 %v233
    %257 = vmatprep.subr.bf16.mxu0 0
    %258 = vmatpush1.bf16.msra.mxu0 %v234
    %259 = vmatprep.subr.bf16.mxu0 0
    %260 = vmatpush1.bf16.msra.mxu0 0
    %261 = vmatprep.subr.bf16.mxu0 0
    %262 = vmatpush1.bf16.msra.mxu0 0
    %263 = vmatprep.subr.bf16.mxu0 0
    %264 = vmatpush1.bf16.msra.mxu0 0
    %265 = vmatprep.subr.bf16.mxu0 0
    %266 = vmatpush1.bf16.msra.mxu0 0
    %267 = vmatprep.subr.bf16.mxu0 0
    %268 = vmatpush1.bf16.msra.mxu0 0
    %269 = vmatprep.subr.bf16.mxu0 0
    %270 = vmatpush1.bf16.msra.mxu0 0
    %271 = vmatprep.subr.bf16.mxu0 0
    %272 = vmatpush1.bf16.msra.mxu0 0
    %273 = vmatprep.subr.bf16.mxu0 0
    %274 = vmatpush1.bf16.msra.mxu0 0
    %275 = vmatprep.mubr.bf16.mxu0 0
    %276 = vmatmul.mubr.bf16.gmra.mrb[0].mxu0 %v190
    %v277 = vpop.f32.mrb[0].mxu0
    %v278 = vadd.f32 %v194, %v277
    %v279 = vpop.f32.mrb[0].mxu0
    %v280 = vpop.f32.mrb[0].mxu0
    %v281 = vpop.f32.mrb[0].mxu0
    %282 = vdwg.mxu0
    %v283 = vxor.u32 %v278, 2147483648
    %v284 = vmul.f32 %v283, 1.442695
    %v285 = vpow.pop %v284
    %v286 = vadd.f32 %v285, 1.0
    %v287 = vrcp.pop %v286
    %v288 = vmul.f32 1.0, %v287
    %v289 = vld [vmem:[#allocation2 + $0x80] sm:$0xf]
    %v290 = vld [vmem:[#allocation2 + $0x84] sm:$0xf]
    %v291 = vld [vmem:[#allocation2 + $0x88] sm:$0xf]
    %v292 = vld [vmem:[#allocation2 + $0x8c] sm:$0xf]
    %v293 = vld [vmem:[#allocation2 + $0x90] sm:$0xf]
    %v294 = vld [vmem:[#allocation2 + $0x94] sm:$0xf]
    %v295 = vld [vmem:[#allocation2 + $0x98] sm:$0xf]
    %v296 = vld [vmem:[#allocation2 + $0x9c] sm:$0xf]
    %v297 = vld [vmem:[#allocation2 + $0xa0] sm:$0xf]
    %v298 = vld [vmem:[#allocation2 + $0xa4] sm:$0xf]
    %v299 = vld [vmem:[#allocation2 + $0xa8] sm:$0xf]
    %v300 = vld [vmem:[#allocation2 + $0xac] sm:$0xf]
    %v301 = vld [vmem:[#allocation2 + $0xb0] sm:$0xf]
    %v302 = vld [vmem:[#allocation2 + $0xb4] sm:$0xf]
    %v303 = vld [vmem:[#allocation2 + $0xb8] sm:$0xf]
    %v304 = vld [vmem:[#allocation2 + $0xbc] sm:$0xf]
    %v305 = vld [vmem:[%s3 + $0x2] sm:$0x1]
    %v306 = vpack.c.bf16 %v288, %v288
    %v307 = vlaneseq
    %v308 = vshrl.u32 %v307, 7
    %v309 = vsub.s32 0, %v308
    %v310 = vrot.slane %v305, %v309
    %v327 = vunpack.c.l.b16 %v289
    %v328 = vunpack.c.l.b16 %v290
    %v329 = vunpack.c.l.b16 %v291
    %v330 = vunpack.c.l.b16 %v292
    %v331 = vunpack.c.l.b16 %v293
    %v332 = vunpack.c.l.b16 %v294
    %v333 = vunpack.c.l.b16 %v295
    %v334 = vunpack.c.l.b16 %v296
    %v335 = vunpack.c.l.b16 %v297
    %v336 = vunpack.c.l.b16 %v298
    %v337 = vunpack.c.l.b16 %v299
    %v338 = vunpack.c.l.b16 %v300
    %v339 = vunpack.c.l.b16 %v301
    %v340 = vunpack.c.l.b16 %v302
    %v341 = vunpack.c.l.b16 %v303
    %v342 = vunpack.c.l.b16 %v304
    %v343 = vpack.c.b16 %v328, %v327
    %v344 = vpack.c.b16 %v330, %v329
    %v345 = vpack.c.b16 %v332, %v331
    %v346 = vpack.c.b16 %v334, %v333
    %v347 = vpack.c.b16 %v336, %v335
    %v348 = vpack.c.b16 %v338, %v337
    %v349 = vpack.c.b16 %v340, %v339
    %v350 = vpack.c.b16 %v342, %v341
    %359 = vmatprep.subr.bf16.mxu0 0
    %360 = vmatpush1.bf16.msra.mxu0 %v343
    %361 = vmatprep.subr.bf16.mxu0 0
    %362 = vmatpush1.bf16.msra.mxu0 %v344
    %363 = vmatprep.subr.bf16.mxu0 0
    %364 = vmatpush1.bf16.msra.mxu0 %v345
    %365 = vmatprep.subr.bf16.mxu0 0
    %366 = vmatpush1.bf16.msra.mxu0 %v346
    %367 = vmatprep.subr.bf16.mxu0 0
    %368 = vmatpush1.bf16.msra.mxu0 %v347
    %369 = vmatprep.subr.bf16.mxu0 0
    %370 = vmatpush1.bf16.msra.mxu0 %v348
    %371 = vmatprep.subr.bf16.mxu0 0
    %372 = vmatpush1.bf16.msra.mxu0 %v349
    %373 = vmatprep.subr.bf16.mxu0 0
    %374 = vmatpush1.bf16.msra.mxu0 %v350
    %375 = vmatprep.subr.bf16.mxu0 0
    %376 = vmatpush1.bf16.msra.mxu0 0
    %377 = vmatprep.subr.bf16.mxu0 0
    %378 = vmatpush1.bf16.msra.mxu0 0
    %379 = vmatprep.subr.bf16.mxu0 0
    %380 = vmatpush1.bf16.msra.mxu0 0
    %381 = vmatprep.subr.bf16.mxu0 0
    %382 = vmatpush1.bf16.msra.mxu0 0
    %383 = vmatprep.subr.bf16.mxu0 0
    %384 = vmatpush1.bf16.msra.mxu0 0
    %385 = vmatprep.subr.bf16.mxu0 0
    %386 = vmatpush1.bf16.msra.mxu0 0
    %387 = vmatprep.subr.bf16.mxu0 0
    %388 = vmatpush1.bf16.msra.mxu0 0
    %389 = vmatprep.subr.bf16.mxu0 0
    %390 = vmatpush1.bf16.msra.mxu0 0
    %391 = vmatprep.mubr.bf16.mxu0 0
    %392 = vmatmul.mubr.bf16.gmra.mrb[0].mxu0 %v306
    %v393 = vpop.f32.mrb[0].mxu0
    %v394 = vadd.f32 %v310, %v393
    %v395 = vpop.f32.mrb[0].mxu0
    %v396 = vpop.f32.mrb[0].mxu0
    %v397 = vpop.f32.mrb[0].mxu0
    %398 = vdwg.mxu0
    %399 = vst [vmem:[#allocation7] sm:$0xff] %v394
    %v400 = vld [vmem:[%s1] sm:$0xff]
    %v401 = vld [vmem:[#allocation5] sm:$0xf]
    %v402 = vld [vmem:[#allocation5 + $0x4] sm:$0xf]
    %v403 = vld [vmem:[#allocation5 + $0x8] sm:$0xf]
    %v404 = vld [vmem:[#allocation5 + $0xc] sm:$0xf]
    %v405 = vld [vmem:[#allocation5 + $0x10] sm:$0xf]
    %v406 = vld [vmem:[#allocation5 + $0x14] sm:$0xf]
    %v407 = vld [vmem:[#allocation5 + $0x18] sm:$0xf]
    %v408 = vld [vmem:[#allocation5 + $0x1c] sm:$0xf]
    %v409 = vld [vmem:[#allocation5 + $0x20] sm:$0xf]
    %v410 = vld [vmem:[#allocation5 + $0x24] sm:$0xf]
    %v411 = vld [vmem:[#allocation5 + $0x28] sm:$0xf]
    %v412 = vld [vmem:[#allocation5 + $0x2c] sm:$0xf]
    %v413 = vld [vmem:[#allocation5 + $0x30] sm:$0xf]
    %v414 = vld [vmem:[#allocation5 + $0x34] sm:$0xf]
    %v415 = vld [vmem:[#allocation5 + $0x38] sm:$0xf]
    %v416 = vld [vmem:[#allocation5 + $0x3c] sm:$0xf]
    %v417 = vld [vmem:[%s5] sm:$0x1]
    %v418 = vpack.c.bf16 %v400, %v400
    %v419 = vlaneseq
    %v420 = vshrl.u32 %v419, 7
    %v421 = vsub.s32 0, %v420
    %v422 = vrot.slane %v417, %v421
    %v439 = vunpack.c.l.b16 %v401
    %v440 = vunpack.c.l.b16 %v402
    %v441 = vunpack.c.l.b16 %v403
    %v442 = vunpack.c.l.b16 %v404
    %v443 = vunpack.c.l.b16 %v405
    %v444 = vunpack.c.l.b16 %v406
    %v445 = vunpack.c.l.b16 %v407
    %v446 = vunpack.c.l.b16 %v408
    %v447 = vunpack.c.l.b16 %v409
    %v448 = vunpack.c.l.b16 %v410
    %v449 = vunpack.c.l.b16 %v411
    %v450 = vunpack.c.l.b16 %v412
    %v451 = vunpack.c.l.b16 %v413
    %v452 = vunpack.c.l.b16 %v414
    %v453 = vunpack.c.l.b16 %v415
    %v454 = vunpack.c.l.b16 %v416
    %v455 = vpack.c.b16 %v440, %v439
    %v456 = vpack.c.b16 %v442, %v441
    %v457 = vpack.c.b16 %v444, %v443
    %v458 = vpack.c.b16 %v446, %v445
    %v459 = vpack.c.b16 %v448, %v447
    %v460 = vpack.c.b16 %v450, %v449
    %v461 = vpack.c.b16 %v452, %v451
    %v462 = vpack.c.b16 %v454, %v453
    %471 = vmatprep.subr.bf16.mxu0 0
    %472 = vmatpush1.bf16.msra.mxu0 %v455
    %473 = vmatprep.subr.bf16.mxu0 0
    %474 = vmatpush1.bf16.msra.mxu0 %v456
    %475 = vmatprep.subr.bf16.mxu0 0
    %476 = vmatpush1.bf16.msra.mxu0 %v457
    %477 = vmatprep.subr.bf16.mxu0 0
    %478 = vmatpush1.bf16.msra.mxu0 %v458
    %479 = vmatprep.subr.bf16.mxu0 0
    %480 = vmatpush1.bf16.msra.mxu0 %v459
    %481 = vmatprep.subr.bf16.mxu0 0
    %482 = vmatpush1.bf16.msra.mxu0 %v460
    %483 = vmatprep.subr.bf16.mxu0 0
    %484 = vmatpush1.bf16.msra.mxu0 %v461
    %485 = vmatprep.subr.bf16.mxu0 0
    %486 = vmatpush1.bf16.msra.mxu0 %v462
    %487 = vmatprep.subr.bf16.mxu0 0
    %488 = vmatpush1.bf16.msra.mxu0 0
    %489 = vmatprep.subr.bf16.mxu0 0
    %490 = vmatpush1.bf16.msra.mxu0 0
    %491 = vmatprep.subr.bf16.mxu0 0
    %492 = vmatpush1.bf16.msra.mxu0 0
    %493 = vmatprep.subr.bf16.mxu0 0
    %494 = vmatpush1.bf16.msra.mxu0 0
    %495 = vmatprep.subr.bf16.mxu0 0
    %496 = vmatpush1.bf16.msra.mxu0 0
    %497 = vmatprep.subr.bf16.mxu0 0
    %498 = vmatpush1.bf16.msra.mxu0 0
    %499 = vmatprep.subr.bf16.mxu0 0
    %500 = vmatpush1.bf16.msra.mxu0 0
    %501 = vmatprep.subr.bf16.mxu0 0
    %502 = vmatpush1.bf16.msra.mxu0 0
    %503 = vmatprep.mubr.bf16.mxu0 0
    %504 = vmatmul.mubr.bf16.gmra.mrb[0].mxu0 %v418
    %v505 = vpop.f32.mrb[0].mxu0
    %v506 = vadd.f32 %v422, %v505
    %v507 = vpop.f32.mrb[0].mxu0
    %v508 = vpop.f32.mrb[0].mxu0
    %v509 = vpop.f32.mrb[0].mxu0
    %510 = vdwg.mxu0
    %v511 = vxor.u32 %v506, 2147483648
    %v512 = vmul.f32 %v511, 1.442695
    %v513 = vpow.pop %v512
    %v514 = vadd.f32 %v513, 1.0
    %v515 = vrcp.pop %v514
    %v516 = vmul.f32 1.0, %v515
    %v517 = vld [vmem:[#allocation5 + $0x40] sm:$0xf]
    %v518 = vld [vmem:[#allocation5 + $0x44] sm:$0xf]
    %v519 = vld [vmem:[#allocation5 + $0x48] sm:$0xf]
    %v520 = vld [vmem:[#allocation5 + $0x4c] sm:$0xf]
    %v521 = vld [vmem:[#allocation5 + $0x50] sm:$0xf]
    %v522 = vld [vmem:[#allocation5 + $0x54] sm:$0xf]
    %v523 = vld [vmem:[#allocation5 + $0x58] sm:$0xf]
    %v524 = vld [vmem:[#allocation5 + $0x5c] sm:$0xf]
    %v525 = vld [vmem:[#allocation5 + $0x60] sm:$0xf]
    %v526 = vld [vmem:[#allocation5 + $0x64] sm:$0xf]
    %v527 = vld [vmem:[#allocation5 + $0x68] sm:$0xf]
    %v528 = vld [vmem:[#allocation5 + $0x6c] sm:$0xf]
    %v529 = vld [vmem:[#allocation5 + $0x70] sm:$0xf]
    %v530 = vld [vmem:[#allocation5 + $0x74] sm:$0xf]
    %v531 = vld [vmem:[#allocation5 + $0x78] sm:$0xf]
    %v532 = vld [vmem:[#allocation5 + $0x7c] sm:$0xf]
    %v533 = vld [vmem:[%s5 + $0x1] sm:$0x1]
    %v534 = vpack.c.bf16 %v516, %v516
    %v535 = vlaneseq
    %v536 = vshrl.u32 %v535, 7
    %v537 = vsub.s32 0, %v536
    %v538 = vrot.slane %v533, %v537
    %v555 = vunpack.c.l.b16 %v517
    %v556 = vunpack.c.l.b16 %v518
    %v557 = vunpack.c.l.b16 %v519
    %v558 = vunpack.c.l.b16 %v520
    %v559 = vunpack.c.l.b16 %v521
    %v560 = vunpack.c.l.b16 %v522
    %v561 = vunpack.c.l.b16 %v523
    %v562 = vunpack.c.l.b16 %v524
    %v563 = vunpack.c.l.b16 %v525
    %v564 = vunpack.c.l.b16 %v526
    %v565 = vunpack.c.l.b16 %v527
    %v566 = vunpack.c.l.b16 %v528
    %v567 = vunpack.c.l.b16 %v529
    %v568 = vunpack.c.l.b16 %v530
    %v569 = vunpack.c.l.b16 %v531
    %v570 = vunpack.c.l.b16 %v532
    %v571 = vpack.c.b16 %v556, %v555
    %v572 = vpack.c.b16 %v558, %v557
    %v573 = vpack.c.b16 %v560, %v559
    %v574 = vpack.c.b16 %v562, %v561
    %v575 = vpack.c.b16 %v564, %v563
    %v576 = vpack.c.b16 %v566, %v565
    %v577 = vpack.c.b16 %v568, %v567
    %v578 = vpack.c.b16 %v570, %v569
    %587 = vmatprep.subr.bf16.mxu0 0
    %588 = vmatpush1.bf16.msra.mxu0 %v571
    %589 = vmatprep.subr.bf16.mxu0 0
    %590 = vmatpush1.bf16.msra.mxu0 %v572
    %591 = vmatprep.subr.bf16.mxu0 0
    %592 = vmatpush1.bf16.msra.mxu0 %v573
    %593 = vmatprep.subr.bf16.mxu0 0
    %594 = vmatpush1.bf16.msra.mxu0 %v574
    %595 = vmatprep.subr.bf16.mxu0 0
    %596 = vmatpush1.bf16.msra.mxu0 %v575
    %597 = vmatprep.subr.bf16.mxu0 0
    %598 = vmatpush1.bf16.msra.mxu0 %v576
    %599 = vmatprep.subr.bf16.mxu0 0
    %600 = vmatpush1.bf16.msra.mxu0 %v577
    %601 = vmatprep.subr.bf16.mxu0 0
    %602 = vmatpush1.bf16.msra.mxu0 %v578
    %603 = vmatprep.subr.bf16.mxu0 0
    %604 = vmatpush1.bf16.msra.mxu0 0
    %605 = vmatprep.subr.bf16.mxu0 0
    %606 = vmatpush1.bf16.msra.mxu0 0
    %607 = vmatprep.subr.bf16.mxu0 0
    %608 = vmatpush1.bf16.msra.mxu0 0
    %609 = vmatprep.subr.bf16.mxu0 0
    %610 = vmatpush1.bf16.msra.mxu0 0
    %611 = vmatprep.subr.bf16.mxu0 0
    %612 = vmatpush1.bf16.msra.mxu0 0
    %613 = vmatprep.subr.bf16.mxu0 0
    %614 = vmatpush1.bf16.msra.mxu0 0
    %615 = vmatprep.subr.bf16.mxu0 0
    %616 = vmatpush1.bf16.msra.mxu0 0
    %617 = vmatprep.subr.bf16.mxu0 0
    %618 = vmatpush1.bf16.msra.mxu0 0
    %619 = vmatprep.mubr.bf16.mxu0 0
    %620 = vmatmul.mubr.bf16.gmra.mrb[0].mxu0 %v534
    %v621 = vpop.f32.mrb[0].mxu0
    %v622 = vadd.f32 %v538, %v621
    %v623 = vpop.f32.mrb[0].mxu0
    %v624 = vpop.f32.mrb[0].mxu0
    %v625 = vpop.f32.mrb[0].mxu0
    %626 = vdwg.mxu0
    %627 = vst [vmem:[#allocation8] sm:$0xff] %v622
    // Predicated region
    $region34: #{deepcca_forward.1} parent=1 // pred_check
      _
    $region35: #{deepcca_forward.1} parent=1 // pred_check_branch
      %629 = sbr.rel (0) target = $region37
    $region36: #{deepcca_forward.1} parent=1 // pred_region
      %s631 = ssub.s32 128, 128
      %632 = vsyncadd [#allocation4], %s631
      %s634 = sshll.u32 [#allocation7], 4
      %s635 = int_to_ptr.vmem [resolvable:$true] %s634
      %637 = dma.vmem_to_hbm [thread:$0]  %s635, 128, %s6, [#allocation4]
    $region37: #{deepcca_forward.1} parent=1 // pred_fallthru
      _
    // Predicated region
    $region38: #{deepcca_forward.1} parent=1 // pred_check
      _
    $region39: #{deepcca_forward.1} parent=1 // pred_check_branch
      %639 = sbr.rel (0) target = $region41
    $region40: #{deepcca_forward.1} parent=1 // pred_region
      %s641 = ssub.s32 128, 128
      %642 = vsyncadd [#allocation9], %s641
      %s644 = sshll.u32 [#allocation8], 4
      %s645 = int_to_ptr.vmem [resolvable:$true] %s644
      %647 = dma.vmem_to_hbm [thread:$0]  %s645, 128, %s7, [#allocation9]
    $region41: #{deepcca_forward.1} parent=1 // pred_fallthru
      _
    // Predicated region
    $region42: #{deepcca_forward.1} parent=1 // pred_check
      _
    $region43: #{deepcca_forward.1} parent=1 // pred_check_branch
      %649 = sbr.rel (0) target = $region45
    $region44: #{deepcca_forward.1} parent=1 // pred_region
      %650 = dma.done [#allocation4], 128
    $region45: #{deepcca_forward.1} parent=1 // pred_fallthru
      _
    // Predicated region
    $region46: #{deepcca_forward.1} parent=1 // pred_check
      _
    $region47: #{deepcca_forward.1} parent=1 // pred_check_branch
      %652 = sbr.rel (0) target = $region49
    $region48: #{deepcca_forward.1} parent=1 // pred_region
      %653 = dma.done [#allocation9], 128
    $region49: #{deepcca_forward.1} parent=1 // pred_fallthru
      _
    %654 = vsyncpa [#allocation3], 1
    %655 = vsyncpa [#allocation6], 1
    %656 = vsyncpa [#allocation4], 1
    %657 = vsyncpa [#allocation9], 1

</llo_original>
